<compile_context>
chip_gen: v6e
topology: v6e:2x2x1
jax: 0.10.0
libtpu: 0.0.40
codegen_flags: <defaults>
</compile_context>

<pallas_src>
import jax
import jax.numpy as jnp
from jax.experimental import pallas as pl
from jax.experimental.pallas import tpu as pltpu


_WEIGHT_RESIDENT_BYTES = 8 * 1024 * 1024   # fast-path cap for a fully resident weight
_VMEM_LIMIT_BYTES = 48 * 1024 * 1024       # fits v7x's 64 MiB with headroom; well under v5e/v6e


def _round_up(x, m):
    return (x + m - 1) // m * m


def _pick_tile(dim_p, cap):
    """Largest multiple of 128 that divides dim_p (itself a multiple of 128) and is <= cap."""
    m = dim_p // 128
    best = 1
    for q in range(1, min(max(cap // 128, 1), m) + 1):
        if m % q == 0:
            best = q
    return best * 128


def linear_kernel(x_ref, w_ref, b_ref, o_ref):
    """One (TM, TN) output tile; K (D_in) is the trailing reduction axis.

    Output is f32 and its block index is K-invariant, so we accumulate directly
    into o_ref (no scratch accumulator, no finalize copy).
    """
    k = pl.program_id(2)
    partial = jnp.dot(x_ref[...], w_ref[...], preferred_element_type=jnp.float32)

    @pl.when(k == 0)
    def _init():
        o_ref[...] = partial + b_ref[...]          # bias added exactly once

    @pl.when(k != 0)
    def _accumulate():
        o_ref[...] += partial


def prepare_logistic_regression_params(weight, bias):
    """One-time (load-time) param prep: pad to 128 multiples and pre-transpose.

    weight: (D_out, D_in) PyTorch layout -> returns w_t (D_in_p, D_out_p) and
    bias as a lane-dense (1, D_out_p) row. Runs eagerly once, never per call.
    """
    d_out, d_in = weight.shape
    d_in_p = _round_up(d_in, 128)
    d_out_p = _round_up(d_out, 128)
    w_pad = jnp.pad(weight.astype(jnp.float32),
                    ((0, d_out_p - d_out), (0, d_in_p - d_in)))
    w_t = jnp.transpose(w_pad)                                   # (D_in_p, D_out_p)
    b2d = jnp.pad(bias.astype(jnp.float32), (0, d_out_p - d_out)).reshape(1, d_out_p)
    return w_t, b2d


def linear_pallas(x, w_t, b2d, d_in, d_out,
                  weight_resident_bytes=_WEIGHT_RESIDENT_BYTES,
                  tn_cap=512, tk_cap=2048, tm_cap=512):
    """x: (B, D_in) f32; w_t: (D_in_p, D_out_p) f32; b2d: (1, D_out_p) f32."""
    x = x.astype(jnp.float32)
    B = x.shape[0]
    d_in_p, d_out_p = w_t.shape

    # ---- Tile selection ----
    TM = min(tm_cap, _round_up(B, 8))
    B_p = _round_up(B, TM)

    if d_in_p * d_out_p * 4 <= weight_resident_bytes:
        # Weight-resident fast path: weight/bias block indices constant over the
        # whole grid -> fetched from HBM exactly once; grid is a batch loop.
        TN, TK = d_out_p, d_in_p
    else:
        TN = _pick_tile(d_out_p, tn_cap)
        TK = _pick_tile(d_in_p, tk_cap)

    # Megacore (v7x 2 TCs): make sure at least one parallel axis has >= 2 tiles.
    if B_p // TM == 1 and d_out_p // TN == 1 and d_out_p >= 256:
        TN = _pick_tile(d_out_p, d_out_p // 2)

    # ---- Per-call work on x only: pad batch to TM multiple, K to D_in_p ----
    if B_p != B or d_in_p != d_in:
        x = jnp.pad(x, ((0, B_p - B), (0, d_in_p - d_in)))

    grid = (B_p // TM, d_out_p // TN, d_in_p // TK)

    out_padded = pl.pallas_call(
        linear_kernel,
        out_shape=jax.ShapeDtypeStruct((B_p, d_out_p), jnp.float32),
        grid_spec=pltpu.PrefetchScalarGridSpec(
            num_scalar_prefetch=0,
            grid=grid,
            in_specs=[
                pl.BlockSpec((TM, TK), lambda i, j, k: (i, k)),   # x tile
                pl.BlockSpec((TK, TN), lambda i, j, k: (k, j)),   # pre-transposed weight
                pl.BlockSpec((1, TN), lambda i, j, k: (0, j)),    # bias row
            ],
            out_specs=pl.BlockSpec((TM, TN), lambda i, j, k: (i, j)),
        ),
        compiler_params=pltpu.CompilerParams(
            # batch / D_out tiles are independent -> parallel (v7x 2-TC sharding);
            # D_in is the reduction -> arbitrary, trailing grid axis.
            dimension_semantics=("parallel", "parallel", "arbitrary"),
            vmem_limit_bytes=_VMEM_LIMIT_BYTES,
        ),
    )(x, w_t, b2d)

    if B_p != B or d_out_p != d_out:
        return out_padded[:B, :d_out]
    return out_padded


def make_logistic_regression(weight, bias):
    """Returns a jitted forward(x) with params prepared once (load-time)."""
    d_out, d_in = weight.shape
    w_t, b2d = prepare_logistic_regression_params(weight, bias)

    @jax.jit
    def forward(x):
        return linear_pallas(x, w_t, b2d, d_in, d_out)

    return forward


if __name__ == "__main__":
    # Small shapes consistent with nn.Linear(input_dim, output_dim)
    batch, input_dim, output_dim = 8, 32, 16

    key = jax.random.PRNGKey(0)
    kx, kw, kb = jax.random.split(key, 3)

    x = jax.random.normal(kx, (batch, input_dim), dtype=jnp.float32)
    # Deterministic init mimicking nn.Linear's uniform(-1/sqrt(fan_in), 1/sqrt(fan_in))
    bound = 1.0 / jnp.sqrt(jnp.float32(input_dim))
    weight = jax.random.uniform(kw, (output_dim, input_dim), dtype=jnp.float32,
                                minval=-bound, maxval=bound)
    bias = jax.random.uniform(kb, (output_dim,), dtype=jnp.float32,
                              minval=-bound, maxval=bound)

    fwd = make_logistic_regression(weight, bias)
    out = jax.block_until_ready(fwd(x))

    ref = x @ weight.T + bias
    assert out.shape == (batch, output_dim)
    assert jnp.allclose(out, ref, atol=1e-5, rtol=1e-5)

    # Second check: exercise the K-tiled accumulation path (k > 0 branch) with
    # awkward (non-128) shapes by forcing the non-resident path and a small TK.
    b2_, din2, dout2 = 40, 300, 200
    k2x, k2w, k2b = jax.random.split(jax.random.PRNGKey(1), 3)
    x2 = jax.random.normal(k2x, (b2_, din2), dtype=jnp.float32)
    w2 = jax.random.normal(k2w, (dout2, din2), dtype=jnp.float32) * 0.05
    bb2 = jax.random.normal(k2b, (dout2,), dtype=jnp.float32)
    w2_t, b2_2d = prepare_logistic_regression_params(w2, bb2)
    out2 = jax.block_until_ready(
        jax.jit(lambda xx: linear_pallas(xx, w2_t, b2_2d, din2, dout2,
                                         weight_resident_bytes=0, tk_cap=128))(x2))
    ref2 = x2 @ w2.T + bb2
    assert out2.shape == (b2_, dout2)
    assert jnp.allclose(out2, ref2, atol=1e-4, rtol=1e-4)

    print("KERNEL_OK")
</pallas_src>

<mosaic_0001>
module attributes {stable_mosaic.version = 11 : i64} {
  func.func @linear_kernel(%arg0: i32, %arg1: i32, %arg2: i32, %arg3: memref<8x128xf32, #tpu.memory_space<vmem>>, %arg4: memref<128x128xf32, #tpu.memory_space<vmem>>, %arg5: memref<1x128xf32, #tpu.memory_space<vmem>>, %arg6: memref<8x128xf32, #tpu.memory_space<vmem>>) attributes {dimension_semantics = [#tpu.dimension_semantics<parallel>, #tpu.dimension_semantics<parallel>, #tpu.dimension_semantics<arbitrary>], iteration_bounds = array<i64: 1, 1, 1>, scalar_prefetch = 0 : i64, scratch_operands = 0 : i64, tpu.core_type = #tpu.core_type<tc>, window_params = [{transform_indices = @transform_0, window_bounds = array<i64: 8, 128>}, {transform_indices = @transform_1, window_bounds = array<i64: 128, 128>}, {transform_indices = @transform_2, window_bounds = array<i64: 1, 128>}, {transform_indices = @transform_3, window_bounds = array<i64: 8, 128>}]} {
    %c0 = arith.constant 0 : index
    %c0_0 = arith.constant 0 : index
    %0 = vector.load %arg3[%c0, %c0_0] : memref<8x128xf32, #tpu.memory_space<vmem>>, vector<8x128xf32>
    %c0_1 = arith.constant 0 : index
    %c0_2 = arith.constant 0 : index
    %1 = vector.load %arg4[%c0_1, %c0_2] : memref<128x128xf32, #tpu.memory_space<vmem>>, vector<128x128xf32>
    %cst = arith.constant dense<0.000000e+00> : vector<8x128xf32>
    %2 = tpu.matmul %0, %1, %cst {dimension_numbers = #tpu.dot_dimension_numbers<[1], [0], [0], [1], [0, 0, 1, 1], [], []>} : vector<8x128xf32>, vector<128x128xf32>, vector<8x128xf32> -> vector<8x128xf32>
    %c0_i32 = arith.constant 0 : i32
    %3 = arith.cmpi eq, %arg2, %c0_i32 : i32
    %4 = arith.extui %3 : i1 to i32
    %c0_i32_3 = arith.constant 0 : i32
    %5 = arith.cmpi ne, %4, %c0_i32_3 : i32
    scf.if %5 {
      %c0_6 = arith.constant 0 : index
      %c0_7 = arith.constant 0 : index
      %9 = vector.load %arg5[%c0_6, %c0_7] : memref<1x128xf32, #tpu.memory_space<vmem>>, vector<1x128xf32>
      %10 = vector.broadcast %9 : vector<1x128xf32> to vector<8x128xf32>
      %11 = arith.addf %2, %10 : vector<8x128xf32>
      %c0_8 = arith.constant 0 : index
      %c0_9 = arith.constant 0 : index
      %12 = vector.load %arg6[%c0_8, %c0_9] : memref<8x128xf32, #tpu.memory_space<vmem>>, vector<8x128xf32>
      tpu.vector_store %arg6[%c0_8, %c0_9], %11 {strides = array<i32>} : memref<8x128xf32, #tpu.memory_space<vmem>>, vector<8x128xf32>,
    } else {
    }
    %c0_i32_4 = arith.constant 0 : i32
    %6 = arith.cmpi ne, %arg2, %c0_i32_4 : i32
    %7 = arith.extui %6 : i1 to i32
    %c0_i32_5 = arith.constant 0 : i32
    %8 = arith.cmpi ne, %7, %c0_i32_5 : i32
    scf.if %8 {
      %c0_6 = arith.constant 0 : index
      %c0_7 = arith.constant 0 : index
      %9 = vector.load %arg6[%c0_6, %c0_7] : memref<8x128xf32, #tpu.memory_space<vmem>>, vector<8x128xf32>
      %10 = arith.addf %9, %2 : vector<8x128xf32>
      %c0_8 = arith.constant 0 : index
      %c0_9 = arith.constant 0 : index
      %11 = vector.load %arg6[%c0_8, %c0_9] : memref<8x128xf32, #tpu.memory_space<vmem>>, vector<8x128xf32>
      tpu.vector_store %arg6[%c0_8, %c0_9], %10 {strides = array<i32>} : memref<8x128xf32, #tpu.memory_space<vmem>>, vector<8x128xf32>,
    } else {
    }
    return
  }
  func.func @transform_0(%arg0: i32, %arg1: i32, %arg2: i32) -> (i32, i32) {
    %c0_i32 = arith.constant 0 : i32
    return %arg0, %arg2 : i32, i32
  }
  func.func @transform_1(%arg0: i32, %arg1: i32, %arg2: i32) -> (i32, i32) {
    %c0_i32 = arith.constant 0 : i32
    return %arg2, %arg1 : i32, i32
  }
  func.func @transform_2(%arg0: i32, %arg1: i32, %arg2: i32) -> (i32, i32) {
    %c0_i32 = arith.constant 0 : i32
    %c0_i32_0 = arith.constant 0 : i32
    return %c0_i32, %arg1 : i32, i32
  }
  func.func @transform_3(%arg0: i32, %arg1: i32, %arg2: i32) -> (i32, i32) {
    %c0_i32 = arith.constant 0 : i32
    return %arg0, %arg1 : i32, i32
  }
}

</mosaic_0001>

<llo_original>
// kernel: forward.1
$region0: #{forward.1}
  #allocation0 [shape = 'u32[]', space=smem, size = 0x4, offset = 0x4, fixed_abs, tag = 'smem constant byte address 0x4 - core index']
  #allocation1 [shape = 'u32[144,128]{1,0:T(1,128)}', space=vmem, size = 0x12000, scoped, tag = 'internal scratch']
  %s0 = inlined_call_operand.vmem [shape: f32[8,128], index: 0, kind: input, shape index: {}]
  %s1 = inlined_call_operand.hbm [shape: f32[128,128], index: 1, kind: input, shape index: {}]
  %s2 = inlined_call_operand.vmem [shape: f32[1,128], index: 2, kind: input, shape index: {}]
  %s3 = inlined_call_operand.hbm [shape: f32[8,128], index: 3, kind: output, shape index: {}]
  %s4 = sld [smem:[#allocation0]]
  $region34: #{forward.1} parent=0
    _
  %s6 = ssub.s32 1, %s4
  %s7 = scalar_select 0, %s6, %s4
  $region1: #{forward.1} parent=0
    #allocation2 [shape = 'u8[65536]{0}', space=vmem, size = 0x10000, scoped, tag = 'input window, operand 1, single buffered']
    #allocation3 [shape = 's32[1]{0}', space=sflag, size = 0x4, scoped, tag = 'scoped memory for forward.1']
    #allocation4 [shape = 's32[1]{0}', space=sflag, size = 0x4, scoped, tag = 'scoped memory for forward.1']
    #allocation5 [shape = 'u8[4096]{0}', space=vmem, size = 0x1000, scoped, tag = 'output window, operand 0, single buffered']
    %8 = vsyncpa [#allocation3], 0
    %9 = vsyncpa [#allocation4], 0
    // Predicated region
    $region2: #{forward.1} parent=1 // pred_check
      _
    $region3: #{forward.1} parent=1 // pred_check_branch
      %11 = sbr.rel (0) target = $region5
    $region4: #{forward.1} parent=1 // pred_region
      _
    $region5: #{forward.1} parent=1 // pred_fallthru
      _
    // Predicated region
    $region6: #{forward.1} parent=1 // pred_check
      _
    $region7: #{forward.1} parent=1 // pred_check_branch
      %13 = sbr.rel (0) target = $region9
    $region8: #{forward.1} parent=1 // pred_region
      %s15 = ssub.s32 2048, 2048
      %16 = vsyncadd [#allocation3], %s15
      %s17 = sshll.u32 [#allocation2], 4
      %s18 = int_to_ptr.vmem [resolvable:$true] %s17
      %23 = dma.hbm_to_vmem [thread:$0]  %s1, 2048, %s18, [#allocation3], 128, 128, 8
    $region9: #{forward.1} parent=1 // pred_fallthru
      _
    // Predicated region
    $region10: #{forward.1} parent=1 // pred_check
      _
    $region11: #{forward.1} parent=1 // pred_check_branch
      %25 = sbr.rel (0) target = $region13
    $region12: #{forward.1} parent=1 // pred_region
      _
    $region13: #{forward.1} parent=1 // pred_fallthru
      _
    // Predicated region
    $region14: #{forward.1} parent=1 // pred_check
      _
    $region15: #{forward.1} parent=1 // pred_check_branch
      %27 = sbr.rel (0) target = $region17
    $region16: #{forward.1} parent=1 // pred_region
      %28 = dma.done [#allocation3], 2048
    $region17: #{forward.1} parent=1 // pred_fallthru
      _
    %v29 = vld [vmem:[%s0] sm:$0xff]
    %v30 = vld [vmem:[#allocation2] sm:$0xff]
    %v31 = vld [vmem:[#allocation2 + $0x8] sm:$0xff]
    %v32 = vld [vmem:[#allocation2 + $0x10] sm:$0xff]
    %v33 = vld [vmem:[#allocation2 + $0x18] sm:$0xff]
    %v34 = vld [vmem:[#allocation2 + $0x20] sm:$0xff]
    %v35 = vld [vmem:[#allocation2 + $0x28] sm:$0xff]
    %v36 = vld [vmem:[#allocation2 + $0x30] sm:$0xff]
    %v37 = vld [vmem:[#allocation2 + $0x38] sm:$0xff]
    %v38 = vld [vmem:[#allocation2 + $0x40] sm:$0xff]
    %v39 = vld [vmem:[#allocation2 + $0x48] sm:$0xff]
    %v40 = vld [vmem:[#allocation2 + $0x50] sm:$0xff]
    %v41 = vld [vmem:[#allocation2 + $0x58] sm:$0xff]
    %v42 = vld [vmem:[#allocation2 + $0x60] sm:$0xff]
    %v43 = vld [vmem:[#allocation2 + $0x68] sm:$0xff]
    %v44 = vld [vmem:[#allocation2 + $0x70] sm:$0xff]
    %v45 = vld [vmem:[#allocation2 + $0x78] sm:$0xff]
    %46 = vmatprep.subr.mxu0 0.0
    %47 = vmatpush1.msra.mxu0 %v45
    %48 = vmatprep.subr.mxu0 0.0
    %49 = vmatpush1.msra.mxu0 %v44
    %50 = vmatprep.subr.mxu0 0.0
    %51 = vmatpush1.msra.mxu0 %v43
    %52 = vmatprep.subr.mxu0 0.0
    %53 = vmatpush1.msra.mxu0 %v42
    %54 = vmatprep.subr.mxu0 0.0
    %55 = vmatpush1.msra.mxu0 %v41
    %56 = vmatprep.subr.mxu0 0.0
    %57 = vmatpush1.msra.mxu0 %v40
    %58 = vmatprep.subr.mxu0 0.0
    %59 = vmatpush1.msra.mxu0 %v39
    %60 = vmatprep.subr.mxu0 0.0
    %61 = vmatpush1.msra.mxu0 %v38
    %62 = vmatprep.subr.mxu0 0.0
    %63 = vmatpush1.msra.mxu0 %v37
    %64 = vmatprep.subr.mxu0 0.0
    %65 = vmatpush1.msra.mxu0 %v36
    %66 = vmatprep.subr.mxu0 0.0
    %67 = vmatpush1.msra.mxu0 %v35
    %68 = vmatprep.subr.mxu0 0.0
    %69 = vmatpush1.msra.mxu0 %v34
    %70 = vmatprep.subr.mxu0 0.0
    %71 = vmatpush1.msra.mxu0 %v33
    %72 = vmatprep.subr.mxu0 0.0
    %73 = vmatpush1.msra.mxu0 %v32
    %74 = vmatprep.subr.mxu0 0.0
    %75 = vmatpush1.msra.mxu0 %v31
    %76 = vmatprep.subr.mxu0 0.0
    %77 = vmatpush1.msra.mxu0 %v30
    %78 = vmatprep.subr.mxu0 0.0
    %79 = vmatpush2.msra.mxu0 0.0
    %80 = vmatprep.subr.mxu0 0.0
    %81 = vmatpush2.msra.mxu0 0.0
    %82 = vmatprep.subr.mxu0 0.0
    %83 = vmatpush2.msra.mxu0 0.0
    %84 = vmatprep.subr.mxu0 0.0
    %85 = vmatpush2.msra.mxu0 0.0
    %86 = vmatprep.subr.mxu0 0.0
    %87 = vmatpush2.msra.mxu0 0.0
    %88 = vmatprep.subr.mxu0 0.0
    %89 = vmatpush2.msra.mxu0 0.0
    %90 = vmatprep.subr.mxu0 0.0
    %91 = vmatpush2.msra.mxu0 0.0
    %92 = vmatprep.subr.mxu0 0.0
    %93 = vmatpush2.msra.mxu0 0.0
    %94 = vmatprep.subr.mxu0 0.0
    %95 = vmatpush2.msra.mxu0 0.0
    %96 = vmatprep.subr.mxu0 0.0
    %97 = vmatpush2.msra.mxu0 0.0
    %98 = vmatprep.subr.mxu0 0.0
    %99 = vmatpush2.msra.mxu0 0.0
    %100 = vmatprep.subr.mxu0 0.0
    %101 = vmatpush2.msra.mxu0 0.0
    %102 = vmatprep.subr.mxu0 0.0
    %103 = vmatpush2.msra.mxu0 0.0
    %104 = vmatprep.subr.mxu0 0.0
    %105 = vmatpush2.msra.mxu0 0.0
    %106 = vmatprep.subr.mxu0 0.0
    %107 = vmatpush2.msra.mxu0 0.0
    %108 = vmatprep.subr.mxu0 0.0
    %109 = vmatpush2.msra.mxu0 0.0
    %110 = vmatprep.mubr.f32.mxu0 0.0
    %111 = vmatmul.mubr.f32.gmra.mxu0 %v29
    %v112 = vpop.f32.mrf.mxu0
    %v113 = vadd.f32 0.0, %v112
    %v114 = vpop.f32.mrf.mxu0
    %115 = vdwg.mxu0
    %p116 = scmp.eq.s32.totalorder 0, 0
    // Predicated region
    $region18: #{forward.1} parent=1 // pred_check
      %p117 = pneg %p116
    $region19: #{forward.1} parent=1 // pred_check_branch
      %119 = sbr.rel (%p117) target = $region21
    $region20: #{forward.1} parent=1 // pred_region
      %v120 = vld [vmem:[%s2] sm:$0x1]
      %v122 = vlaneseq
      %v123 = vshrl.u32 %v122, 7
      %v124 = vsub.s32 0, %v123
      %v125 = vrot.slane %v120, %v124
      %v127 = vadd.f32 %v113, %v125
      %128 = vst [vmem:[#allocation5] sm:$0xff] %v127
    $region21: #{forward.1} parent=1 // pred_fallthru
      _
    %p129 = scmp.ne.s32.totalorder 0, 0
    // Predicated region
    $region22: #{forward.1} parent=1 // pred_check
      %p130 = pneg %p129
    $region23: #{forward.1} parent=1 // pred_check_branch
      %132 = sbr.rel (%p130) target = $region25
    $region24: #{forward.1} parent=1 // pred_region
      %v133 = vld [vmem:[#allocation5] sm:$0xff]
      %v134 = vadd.f32 %v133, %v113
      %135 = vst [vmem:[#allocation5] sm:$0xff] %v134
    $region25: #{forward.1} parent=1 // pred_fallthru
      _
    // Predicated region
    $region26: #{forward.1} parent=1 // pred_check
      _
    $region27: #{forward.1} parent=1 // pred_check_branch
      %137 = sbr.rel (0) target = $region29
    $region28: #{forward.1} parent=1 // pred_region
      %s139 = ssub.s32 128, 128
      %140 = vsyncadd [#allocation4], %s139
      %s142 = sshll.u32 [#allocation5], 4
      %s143 = int_to_ptr.vmem [resolvable:$true] %s142
      %145 = dma.vmem_to_hbm [thread:$0]  %s143, 128, %s3, [#allocation4]
    $region29: #{forward.1} parent=1 // pred_fallthru
      _
    // Predicated region
    $region30: #{forward.1} parent=1 // pred_check
      _
    $region31: #{forward.1} parent=1 // pred_check_branch
      %147 = sbr.rel (0) target = $region33
    $region32: #{forward.1} parent=1 // pred_region
      %148 = dma.done [#allocation4], 128
    $region33: #{forward.1} parent=1 // pred_fallthru
      _
    %149 = vsyncpa [#allocation3], 1
    %150 = vsyncpa [#allocation4], 1

</llo_original>
